<compile_context>
chip_gen: v5e
topology: v5e:2x2
jax: 0.10.0
libtpu: 0.0.40
codegen_flags: <defaults>
</compile_context>

<pallas_src>
import math

import jax
import jax.numpy as jnp
from jax.experimental import pallas as pl
from jax.experimental.pallas import tpu as pltpu

_LANE = 128
_SUBLANE_PACK = 32            # full sublane pack: f32 needs 8, bf16 16, int8/fp8 32
_TARGET_BLOCK_BYTES = 4 << 20  # 2-4 MiB blocks keep the copy near HBM roofline
_SMALL_BYTES = 1 << 20         # below this, launch overhead dominates -> no kernel


def _copy_kernel(x_ref, o_ref):
    # Straight ref-to-ref copy of a lane/sublane-dense block.
    o_ref[...] = x_ref[...]


def _largest_aligned_divisor(total: int, align: int, cap: int) -> int:
    """Largest multiple of `align` that divides `total` and is <= cap (0 if none)."""
    best = 0
    d = align
    limit = min(cap, total)
    while d <= limit:
        if total % d == 0:
            best = d
        d += align
    return best


def _tiled_copy_2d(x2d: jax.Array, tile_r: int, tile_c: int, itemsize: int) -> jax.Array:
    r, c = x2d.shape
    grid = (pl.cdiv(r, tile_r), pl.cdiv(c, tile_c))
    block_bytes = tile_r * tile_c * itemsize
    # in + out, double-buffered (4x block) plus headroom, capped well below
    # v7x's 64 MiB physical VMEM.
    vmem_limit = int(min(40 << 20, max(4 << 20, 5 * block_bytes)))
    return pl.pallas_call(
        _copy_kernel,
        out_shape=jax.ShapeDtypeStruct((r, c), x2d.dtype),
        grid_spec=pltpu.PrefetchScalarGridSpec(
            num_scalar_prefetch=0,
            grid=grid,
            in_specs=[pl.BlockSpec((tile_r, tile_c), lambda i, j: (i, j))],
            out_specs=pl.BlockSpec((tile_r, tile_c), lambda i, j: (i, j)),
        ),
        compiler_params=pltpu.CompilerParams(
            dimension_semantics=("parallel", "parallel"),
            vmem_limit_bytes=vmem_limit,
        ),
        input_output_aliases={0: 0},   # output may reuse the input HBM buffer
    )(x2d)


def flatten(x: jax.Array, *, force_kernel: bool = False) -> jax.Array:
    """Pallas equivalent of torch `input.view(input.size(0), -1)`."""
    n = x.shape[0]
    flat = math.prod(x.shape[1:]) if x.ndim > 1 else 1
    total = n * flat
    itemsize = jnp.dtype(x.dtype).itemsize
    total_bytes = total * itemsize

    # Fast path: row-major flatten of a contiguous buffer is a free metadata
    # reshape; for small tensors the copy kernel is strictly slower.
    if not force_kernel and total_bytes < _SMALL_BYTES:
        return x.reshape(n, flat)

    if total % _LANE == 0:
        # Collapse the whole contiguous buffer to (R, C): C is a large
        # multiple of 128 that divides `total` (so every store is lane-dense
        # and unmasked), decoupling tile choice from batch size and dtype.
        c_cap = max(
            _LANE,
            (_TARGET_BLOCK_BYTES // (_SUBLANE_PACK * itemsize)) // _LANE * _LANE,
        )
        c = _largest_aligned_divisor(total, _LANE, c_cap)
        r = total // c
        if r <= _SUBLANE_PACK:
            tile_r = r  # full dim -> always a legal block shape
        else:
            tile_r = max(
                _SUBLANE_PACK,
                (_TARGET_BLOCK_BYTES // (c * itemsize))
                // _SUBLANE_PACK * _SUBLANE_PACK,
            )
            if tile_r >= r:
                # Keep >= 2 row blocks so both v7x TensorCores stream.
                half = pl.cdiv(r, 2)
                tile_r = pl.cdiv(half, _SUBLANE_PACK) * _SUBLANE_PACK
            tile_r = min(tile_r, r)
        y = _tiled_copy_2d(x.reshape(r, c), tile_r, c, itemsize)
        return y.reshape(n, flat)

    # Fallback (total not a multiple of 128; rare for conv-net activations):
    # copy the (n, flat) view with a dtype-aware sublane tile.
    pack = max(8, 32 // itemsize)           # 8 for f32, 16 for bf16, 32 for int8/fp8
    tile_n = n if n <= pack else pack
    f_cap = max(_LANE, (_TARGET_BLOCK_BYTES // (tile_n * itemsize)) // _LANE * _LANE)
    tile_f = flat if flat <= f_cap else f_cap
    return _tiled_copy_2d(x.reshape(n, flat), tile_n, tile_f, itemsize)


if __name__ == "__main__":
    key = jax.random.PRNGKey(0)
    # Small NCHW input consistent with a conv-net feature map.
    x = jax.random.normal(key, (2, 4, 16, 16), dtype=jnp.float32)
    y_ref = x.reshape(x.shape[0], -1)   # == torch .view semantics

    # Kernel path (forced: this shape would otherwise take the free-reshape
    # fast path).  total = 2048 elements -> collapsed (1, 2048) lane-dense copy.
    y = flatten(x, force_kernel=True)
    y = jax.block_until_ready(y)
    assert y.shape == (2, 4 * 16 * 16), y.shape
    assert jnp.array_equal(y, y_ref), "kernel path mismatch"

    # Default path (small input -> free metadata reshape, no pallas_call).
    y_fast = jax.block_until_ready(flatten(x))
    assert jnp.array_equal(y_fast, y_ref), "fast path mismatch"

    print("KERNEL_OK")
</pallas_src>

<mosaic_0001>
module attributes {stable_mosaic.version = 11 : i64} {
  func.func @_copy_kernel(%arg0: i32, %arg1: i32, %arg2: memref<1x2048xf32, #tpu.memory_space<vmem>>, %arg3: memref<1x2048xf32, #tpu.memory_space<vmem>>) attributes {dimension_semantics = [#tpu.dimension_semantics<parallel>, #tpu.dimension_semantics<parallel>], iteration_bounds = array<i64: 1, 1>, scalar_prefetch = 0 : i64, scratch_operands = 0 : i64, tpu.core_type = #tpu.core_type<tc>, window_params = [{transform_indices = @transform_0, window_bounds = array<i64: 1, 2048>}, {transform_indices = @transform_1, window_bounds = array<i64: 1, 2048>}]} {
    %c0 = arith.constant 0 : index
    %c0_0 = arith.constant 0 : index
    %0 = vector.load %arg2[%c0, %c0_0] : memref<1x2048xf32, #tpu.memory_space<vmem>>, vector<1x2048xf32>
    %c0_1 = arith.constant 0 : index
    %c0_2 = arith.constant 0 : index
    %1 = vector.load %arg3[%c0_1, %c0_2] : memref<1x2048xf32, #tpu.memory_space<vmem>>, vector<1x2048xf32>
    tpu.vector_store %arg3[%c0_1, %c0_2], %0 {strides = array<i32>} : memref<1x2048xf32, #tpu.memory_space<vmem>>, vector<1x2048xf32>,
    return
  }
  func.func @transform_0(%arg0: i32, %arg1: i32) -> (i32, i32) {
    %c0_i32 = arith.constant 0 : i32
    return %arg0, %arg1 : i32, i32
  }
  func.func @transform_1(%arg0: i32, %arg1: i32) -> (i32, i32) {
    %c0_i32 = arith.constant 0 : i32
    return %arg0, %arg1 : i32, i32
  }
}

</mosaic_0001>

<llo_original>
// kernel: tpu_custom_call.1
$region0: #{tpu_custom_call.1}
  #allocation0 [shape = 'u32[]', space=smem, size = 0x4, offset = 0x4, fixed_abs, tag = 'smem constant byte address 0x4 - core index']
  #allocation1 [shape = 'u32[72,128]{1,0:T(1,128)}', space=vmem, size = 0x9000, scoped, tag = 'internal scratch']
  %s0 = inlined_call_operand.hbm [shape: f32[1,2048], index: 0, kind: input, shape index: {}, may-alias: {0,1}]
  %s1 = inlined_call_operand.hbm [shape: f32[1,2048], index: 1, kind: output, shape index: {}, may-alias: {0,1}]
  %s2 = sld [smem:[#allocation0]]
  $region18: #{tpu_custom_call.1} parent=0
    _
  %s4 = ssub.s32 1, %s2
  %s5 = scalar_select 0, %s4, %s2
  $region1: #{tpu_custom_call.1} parent=0
    #allocation2 [shape = 'u8[8192]{0}', space=vmem, size = 0x2000, scoped, tag = 'input window, operand 0, single buffered']
    #allocation3 [shape = 's32[1]{0}', space=sflag, size = 0x4, scoped, tag = 'scoped memory for tpu_custom_call.1']
    #allocation4 [shape = 's32[1]{0}', space=sflag, size = 0x4, scoped, tag = 'scoped memory for tpu_custom_call.1']
    #allocation5 [shape = 'u8[8192]{0}', space=vmem, size = 0x2000, scoped, tag = 'output window, operand 0, single buffered']
    %6 = vsyncpa [#allocation3], 0
    %7 = vsyncpa [#allocation4], 0
    // Predicated region
    $region2: #{tpu_custom_call.1} parent=1 // pred_check
      _
    $region3: #{tpu_custom_call.1} parent=1 // pred_check_branch
      %9 = sbr.rel (0) target = $region5
    $region4: #{tpu_custom_call.1} parent=1 // pred_region
      %11 = vsyncadd [#allocation3], 0
      %s13 = sshll.u32 %s0, 4
      %s14 = int_to_ptr.hbm [resolvable:$true] %s13
      %s15 = sshll.u32 [#allocation2], 4
      %s16 = int_to_ptr.vmem [resolvable:$true] %s15
      %18 = dma.hbm_to_vmem [thread:$0]  %s14, 256, %s16, [#allocation3]
    $region5: #{tpu_custom_call.1} parent=1 // pred_fallthru
      _
    // Predicated region
    $region6: #{tpu_custom_call.1} parent=1 // pred_check
      _
    $region7: #{tpu_custom_call.1} parent=1 // pred_check_branch
      %20 = sbr.rel (0) target = $region9
    $region8: #{tpu_custom_call.1} parent=1 // pred_region
      %22 = dma.done [#allocation3], 256
    $region9: #{tpu_custom_call.1} parent=1 // pred_fallthru
      _
    %v23 = vld [vmem:[#allocation2] sm:$0xff]
    %v24 = vld [vmem:[#allocation2 + $0x8] sm:$0xff]
    %25 = vst [vmem:[#allocation5] sm:$0xff] %v23
    %26 = vst [vmem:[#allocation5 + $0x8] sm:$0xff] %v24
    // Predicated region
    $region10: #{tpu_custom_call.1} parent=1 // pred_check
      _
    $region11: #{tpu_custom_call.1} parent=1 // pred_check_branch
      %28 = sbr.rel (0) target = $region13
    $region12: #{tpu_custom_call.1} parent=1 // pred_region
      %30 = vsyncadd [#allocation4], 0
      %s32 = sshll.u32 [#allocation5], 4
      %s33 = int_to_ptr.vmem [resolvable:$true] %s32
      %s34 = sshll.u32 %s1, 4
      %s35 = int_to_ptr.hbm [resolvable:$true] %s34
      %37 = dma.vmem_to_hbm [thread:$0]  %s33, 256, %s35, [#allocation4]
    $region13: #{tpu_custom_call.1} parent=1 // pred_fallthru
      _
    // Predicated region
    $region14: #{tpu_custom_call.1} parent=1 // pred_check
      _
    $region15: #{tpu_custom_call.1} parent=1 // pred_check_branch
      %39 = sbr.rel (0) target = $region17
    $region16: #{tpu_custom_call.1} parent=1 // pred_region
      %41 = dma.done [#allocation4], 256
    $region17: #{tpu_custom_call.1} parent=1 // pred_fallthru
      _
    %42 = vsyncpa [#allocation3], 1
    %43 = vsyncpa [#allocation4], 1

</llo_original>
